<compile_context>
chip_gen: v5e
topology: v5e:2x2
jax: 0.10.0
libtpu: 0.0.40
codegen_flags: <defaults>
</compile_context>

<pallas_src>
import math
import functools

import jax
import jax.numpy as jnp
from jax.experimental import pallas as pl
from jax.experimental.pallas import tpu as pltpu


def _layer_norm(x, gamma, beta, eps=1e-6):
    mean = jnp.mean(x, axis=-1, keepdims=True)
    var = jnp.mean((x - mean) ** 2, axis=-1, keepdims=True)
    return (x - mean) * jax.lax.rsqrt(var + eps) * gamma + beta


def _fused_kernel(q_ref, k_ref, v_ref, mask_ref, w4_ref, vec_ref,
                  w1_ref, b1_ref, w2_ref, o_ref, *, head_count, dim_per_head):
    """Fused MHA + LN-residual + FFN + LN-residual, batch folded onto M."""
    H, dh = head_count, dim_per_head
    f32 = jnp.float32

    q2 = q_ref[...]                       # (B*Lq, D)   f32
    k2 = k_ref[...]                       # (B*Lk, D)   f32
    v2 = v_ref[...]                       # (B*Lk, D)   f32
    mask_add = mask_ref[...]              # (B*Lq, B*Lk) 0 / -1e30

    # Packed weight slabs (static leading-dim / sublane slices, no relayout).
    wq = w4_ref[0]                        # (D, Dmodel)
    wk = w4_ref[1]
    wv = w4_ref[2]
    wo = w4_ref[3]
    vec = vec_ref[...]                    # (9, Dmodel)
    bq, bk, bv, bo = vec[0:1], vec[1:2], vec[2:3], vec[3:4]
    g1, bn1 = vec[4:5], vec[5:6]
    b2 = vec[6:7]
    g2, bn2 = vec[7:8], vec[8:9]

    # Full-width QKV projections: 3 MXU matmuls with N = Dmodel.
    scale = 1.0 / math.sqrt(dh)
    Qf = (jnp.dot(q2, wq, preferred_element_type=f32) + bq) * scale
    Kf = jnp.dot(k2, wk, preferred_element_type=f32) + bk
    Vf = jnp.dot(v2, wv, preferred_element_type=f32) + bv

    # Per-head attention on static lane slices of the full-width projections.
    # The additive block-diagonal mask keeps attention within each batch
    # element (softmax rows over masked entries are exactly 0).
    # TODO(synk): optional user attention mask (masked_fill with -1e18) not
    # plumbed through; this kernel implements the mask=None path only.
    ctx_heads = []
    for h in range(H):
        lo = h * dh
        qh = Qf[:, lo:lo + dh]
        kh = Kf[:, lo:lo + dh]
        vh = Vf[:, lo:lo + dh]
        s = jnp.dot(qh, kh.T, preferred_element_type=f32) + mask_add
        p = jnp.exp(s - jnp.max(s, axis=-1, keepdims=True))
        attn = p / jnp.sum(p, axis=-1, keepdims=True)      # exact divide
        ctx_heads.append(jnp.dot(attn, vh, preferred_element_type=f32))
    ctx = jnp.concatenate(ctx_heads, axis=-1)              # (B*Lq, Dmodel)

    # Single output projection; the head sum lives in the K contraction.
    mha = jnp.dot(ctx, wo, preferred_element_type=f32) + bo

    # LayerNormResidual #1: identity shortcut (query_size == output_size),
    # dropout is eval-mode identity.
    # TODO(synk): if query_size != output_size the PyTorch module uses a
    # Linear shortcut; not needed for this configuration.
    x = _layer_norm(q2 + mha, g1, bn1)

    # Feed-forward (Linear -> ReLU -> Linear) + LayerNormResidual #2.
    hid = jnp.maximum(
        jnp.dot(x, w1_ref[...], preferred_element_type=f32) + b1_ref[...], 0.0)
    y = jnp.dot(hid, w2_ref[...], preferred_element_type=f32) + b2
    o_ref[...] = _layer_norm(x + y, g2, bn2)


def self_attention_layer(q, k, v, params, head_count):
    B, Lq, Dq = q.shape
    _, Lk, Dm = k.shape
    Dmodel = params["wq"].shape[1]
    H = head_count
    dh = Dmodel // H
    assert Dq == Dm == Dmodel, "packed path assumes query==mem==output size"
    f32 = jnp.float32

    # Host-side (free) flattening of the batch onto the M dimension.
    q2 = q.reshape(B * Lq, Dq).astype(f32)
    k2 = k.reshape(B * Lk, Dm).astype(f32)
    v2 = v.reshape(B * Lk, Dm).astype(f32)

    # Additive block-diagonal mask so folded-batch attention never crosses
    # batch boundaries.
    rb = jnp.repeat(jnp.arange(B), Lq)
    cb = jnp.repeat(jnp.arange(B), Lk)
    mask_add = jnp.where(rb[:, None] == cb[None, :], 0.0, -1e30).astype(f32)

    # Host-side weight packing: 19 operands -> 9.
    w4 = jnp.stack([params["wq"], params["wk"],
                    params["wv"], params["wo"]]).astype(f32)       # (4, D, Dmodel)
    vec = jnp.concatenate([
        params["bq"], params["bk"], params["bv"], params["bo"],
        params["ln1_g"], params["ln1_b"], params["b2"],
        params["ln2_g"], params["ln2_b"]], axis=0).astype(f32)     # (9, Dmodel)
    w1 = params["w1"].astype(f32)
    b1 = params["b1"].astype(f32)
    w2 = params["w2"].astype(f32)

    inputs = (q2, k2, v2, mask_add, w4, vec, w1, b1, w2)

    def full_spec(a):
        nd = a.ndim
        return pl.BlockSpec(a.shape, lambda i, nd=nd: (0,) * nd)

    out2 = pl.pallas_call(
        functools.partial(_fused_kernel, head_count=H, dim_per_head=dh),
        out_shape=jax.ShapeDtypeStruct((B * Lq, Dmodel), f32),
        grid=(1,),
        in_specs=[full_spec(a) for a in inputs],
        out_specs=pl.BlockSpec((B * Lq, Dmodel), lambda i: (0, 0)),
        compiler_params=pltpu.CompilerParams(
            dimension_semantics=("arbitrary",)),
    )(*inputs)
    return out2.reshape(B, Lq, Dmodel)


def reference(q, k, v, params, head_count):
    """Pure-JAX f32 reference mirroring the PyTorch forward (eval, mask=None)."""
    def ln(x, g, b):
        mean = jnp.mean(x, -1, keepdims=True)
        var = jnp.mean((x - mean) ** 2, -1, keepdims=True)
        return (x - mean) / jnp.sqrt(var + 1e-6) * g + b

    B, Lq, _ = q.shape
    Dmodel = params["wq"].shape[1]
    dh = Dmodel // head_count

    Q = q @ params["wq"] + params["bq"]
    K = k @ params["wk"] + params["bk"]
    V = v @ params["wv"] + params["bv"]

    def split(x):
        return x.reshape(B, -1, head_count, dh).transpose(0, 2, 1, 3)

    Qh, Kh, Vh = split(Q) / math.sqrt(dh), split(K), split(V)
    scores = jnp.einsum("bhqd,bhkd->bhqk", Qh, Kh)
    attn = jax.nn.softmax(scores, axis=-1)
    ctx = jnp.einsum("bhqk,bhkd->bhqd", attn, Vh)
    ctx = ctx.transpose(0, 2, 1, 3).reshape(B, Lq, Dmodel)
    mha = ctx @ params["wo"] + params["bo"]
    x = ln(q + mha, params["ln1_g"], params["ln1_b"])
    h = jax.nn.relu(x @ params["w1"] + params["b1"])
    y = h @ params["w2"] + params["b2"]
    return ln(x + y, params["ln2_g"], params["ln2_b"])


if __name__ == "__main__":
    B, Lq, Lk = 2, 8, 8
    query_size = mem_size = output_size = 32
    heads = 4

    key = jax.random.PRNGKey(0)
    ks = jax.random.split(key, 16)

    def init(kk, shape, scale=0.1):
        return (scale * jax.random.normal(kk, shape)).astype(jnp.float32)

    params = {
        "wq": init(ks[0], (query_size, output_size)),
        "bq": init(ks[1], (1, output_size)),
        "wk": init(ks[2], (mem_size, output_size)),
        "bk": init(ks[3], (1, output_size)),
        "wv": init(ks[4], (mem_size, output_size)),
        "bv": init(ks[5], (1, output_size)),
        "wo": init(ks[6], (output_size, output_size)),
        "bo": init(ks[7], (1, output_size)),
        "ln1_g": jnp.ones((1, output_size), jnp.float32),
        "ln1_b": jnp.zeros((1, output_size), jnp.float32),
        "w1": init(ks[8], (output_size, output_size * 4)),
        "b1": init(ks[9], (1, output_size * 4)),
        "w2": init(ks[10], (output_size * 4, output_size)),
        "b2": init(ks[11], (1, output_size)),
        "ln2_g": jnp.ones((1, output_size), jnp.float32),
        "ln2_b": jnp.zeros((1, output_size), jnp.float32),
    }

    q = jax.random.normal(ks[12], (B, Lq, query_size), jnp.float32)
    k = jax.random.normal(ks[13], (B, Lk, mem_size), jnp.float32)
    v = jax.random.normal(ks[14], (B, Lk, mem_size), jnp.float32)

    out = self_attention_layer(q, k, v, params, heads)
    out = jax.block_until_ready(out)

    ref = reference(q, k, v, params, heads)
    max_err = float(jnp.max(jnp.abs(out - ref)))
    # f32 everywhere + exact softmax divide: tolerance tightened vs the old
    # bf16/approx-recip version (kept at 2e-2 only to absorb MXU default-
    # precision differences between the Pallas kernel and the XLA reference).
    assert jnp.allclose(out, ref, rtol=2e-2, atol=2e-2), max_err

    print("KERNEL_OK")
</pallas_src>

<mosaic_0001>
module attributes {stable_mosaic.version = 11 : i64} {
  func.func @_fused_kernel(%arg0: i32, %arg1: memref<16x32xf32, #tpu.memory_space<vmem>>, %arg2: memref<16x32xf32, #tpu.memory_space<vmem>>, %arg3: memref<16x32xf32, #tpu.memory_space<vmem>>, %arg4: memref<16x16xf32, #tpu.memory_space<vmem>>, %arg5: memref<4x32x32xf32, #tpu.memory_space<vmem>>, %arg6: memref<9x32xf32, #tpu.memory_space<vmem>>, %arg7: memref<32x128xf32, #tpu.memory_space<vmem>>, %arg8: memref<1x128xf32, #tpu.memory_space<vmem>>, %arg9: memref<128x32xf32, #tpu.memory_space<vmem>>, %arg10: memref<16x32xf32, #tpu.memory_space<vmem>>) attributes {dimension_semantics = [#tpu.dimension_semantics<arbitrary>], iteration_bounds = array<i64: 1>, scalar_prefetch = 0 : i64, scratch_operands = 0 : i64, tpu.core_type = #tpu.core_type<tc>, window_params = [{pipeline_mode = #tpu.pipeline_mode<synchronous>, transform_indices = @transform_0, window_bounds = array<i64: 16, 32>}, {pipeline_mode = #tpu.pipeline_mode<synchronous>, transform_indices = @transform_1, window_bounds = array<i64: 16, 32>}, {pipeline_mode = #tpu.pipeline_mode<synchronous>, transform_indices = @transform_2, window_bounds = array<i64: 16, 32>}, {pipeline_mode = #tpu.pipeline_mode<synchronous>, transform_indices = @transform_3, window_bounds = array<i64: 16, 16>}, {pipeline_mode = #tpu.pipeline_mode<synchronous>, transform_indices = @transform_4, window_bounds = array<i64: 4, 32, 32>}, {pipeline_mode = #tpu.pipeline_mode<synchronous>, transform_indices = @transform_5, window_bounds = array<i64: 9, 32>}, {pipeline_mode = #tpu.pipeline_mode<synchronous>, transform_indices = @transform_6, window_bounds = array<i64: 32, 128>}, {pipeline_mode = #tpu.pipeline_mode<synchronous>, transform_indices = @transform_7, window_bounds = array<i64: 1, 128>}, {pipeline_mode = #tpu.pipeline_mode<synchronous>, transform_indices = @transform_8, window_bounds = array<i64: 128, 32>}, {pipeline_mode = #tpu.pipeline_mode<synchronous>, transform_indices = @transform_9, window_bounds = array<i64: 16, 32>}]} {
    %c0 = arith.constant 0 : index
    %c0_0 = arith.constant 0 : index
    %0 = vector.load %arg1[%c0, %c0_0] : memref<16x32xf32, #tpu.memory_space<vmem>>, vector<16x32xf32>
    %c0_1 = arith.constant 0 : index
    %c0_2 = arith.constant 0 : index
    %1 = vector.load %arg2[%c0_1, %c0_2] : memref<16x32xf32, #tpu.memory_space<vmem>>, vector<16x32xf32>
    %c0_3 = arith.constant 0 : index
    %c0_4 = arith.constant 0 : index
    %2 = vector.load %arg3[%c0_3, %c0_4] : memref<16x32xf32, #tpu.memory_space<vmem>>, vector<16x32xf32>
    %c0_5 = arith.constant 0 : index
    %c0_6 = arith.constant 0 : index
    %3 = vector.load %arg4[%c0_5, %c0_6] : memref<16x16xf32, #tpu.memory_space<vmem>>, vector<16x16xf32>
    %c0_7 = arith.constant 0 : index
    %c0_8 = arith.constant 0 : index
    %c0_9 = arith.constant 0 : index
    %4 = vector.load %arg5[%c0_7, %c0_8, %c0_9] : memref<4x32x32xf32, #tpu.memory_space<vmem>>, vector<1x32x32xf32>
    %5 = vector.shape_cast %4 : vector<1x32x32xf32> to vector<32x32xf32>
    %c1 = arith.constant 1 : index
    %c0_10 = arith.constant 0 : index
    %c0_11 = arith.constant 0 : index
    %6 = vector.load %arg5[%c1, %c0_10, %c0_11] : memref<4x32x32xf32, #tpu.memory_space<vmem>>, vector<1x32x32xf32>
    %7 = vector.shape_cast %6 : vector<1x32x32xf32> to vector<32x32xf32>
    %c2 = arith.constant 2 : index
    %c0_12 = arith.constant 0 : index
    %c0_13 = arith.constant 0 : index
    %8 = vector.load %arg5[%c2, %c0_12, %c0_13] : memref<4x32x32xf32, #tpu.memory_space<vmem>>, vector<1x32x32xf32>
    %9 = vector.shape_cast %8 : vector<1x32x32xf32> to vector<32x32xf32>
    %c3 = arith.constant 3 : index
    %c0_14 = arith.constant 0 : index
    %c0_15 = arith.constant 0 : index
    %10 = vector.load %arg5[%c3, %c0_14, %c0_15] : memref<4x32x32xf32, #tpu.memory_space<vmem>>, vector<1x32x32xf32>
    %11 = vector.shape_cast %10 : vector<1x32x32xf32> to vector<32x32xf32>
    %c0_16 = arith.constant 0 : index
    %c0_17 = arith.constant 0 : index
    %12 = vector.load %arg6[%c0_16, %c0_17] : memref<9x32xf32, #tpu.memory_space<vmem>>, vector<9x32xf32>
    %13 = vector.extract_strided_slice %12 {offsets = [0, 0], sizes = [1, 32], strides = [1, 1]} : vector<9x32xf32> to vector<1x32xf32>
    %14 = vector.extract_strided_slice %12 {offsets = [1, 0], sizes = [1, 32], strides = [1, 1]} : vector<9x32xf32> to vector<1x32xf32>
    %15 = vector.extract_strided_slice %12 {offsets = [2, 0], sizes = [1, 32], strides = [1, 1]} : vector<9x32xf32> to vector<1x32xf32>
    %16 = vector.extract_strided_slice %12 {offsets = [3, 0], sizes = [1, 32], strides = [1, 1]} : vector<9x32xf32> to vector<1x32xf32>
    %17 = vector.extract_strided_slice %12 {offsets = [4, 0], sizes = [1, 32], strides = [1, 1]} : vector<9x32xf32> to vector<1x32xf32>
    %18 = vector.extract_strided_slice %12 {offsets = [5, 0], sizes = [1, 32], strides = [1, 1]} : vector<9x32xf32> to vector<1x32xf32>
    %19 = vector.extract_strided_slice %12 {offsets = [6, 0], sizes = [1, 32], strides = [1, 1]} : vector<9x32xf32> to vector<1x32xf32>
    %20 = vector.extract_strided_slice %12 {offsets = [7, 0], sizes = [1, 32], strides = [1, 1]} : vector<9x32xf32> to vector<1x32xf32>
    %21 = vector.extract_strided_slice %12 {offsets = [8, 0], sizes = [1, 32], strides = [1, 1]} : vector<9x32xf32> to vector<1x32xf32>
    %cst = arith.constant dense<0.000000e+00> : vector<16x32xf32>
    %22 = tpu.matmul %0, %5, %cst {dimension_numbers = #tpu.dot_dimension_numbers<[1], [0], [0], [1], [0, 0, 1, 1], [], []>} : vector<16x32xf32>, vector<32x32xf32>, vector<16x32xf32> -> vector<16x32xf32>
    %23 = vector.broadcast %13 : vector<1x32xf32> to vector<16x32xf32>
    %24 = arith.addf %22, %23 : vector<16x32xf32>
    %cst_18 = arith.constant 0.353553385 : f32
    %25 = vector.broadcast %cst_18 : f32 to vector<16x32xf32>
    %26 = arith.mulf %24, %25 : vector<16x32xf32>
    %cst_19 = arith.constant dense<0.000000e+00> : vector<16x32xf32>
    %27 = tpu.matmul %1, %7, %cst_19 {dimension_numbers = #tpu.dot_dimension_numbers<[1], [0], [0], [1], [0, 0, 1, 1], [], []>} : vector<16x32xf32>, vector<32x32xf32>, vector<16x32xf32> -> vector<16x32xf32>
    %28 = vector.broadcast %14 : vector<1x32xf32> to vector<16x32xf32>
    %29 = arith.addf %27, %28 : vector<16x32xf32>
    %cst_20 = arith.constant dense<0.000000e+00> : vector<16x32xf32>
    %30 = tpu.matmul %2, %9, %cst_20 {dimension_numbers = #tpu.dot_dimension_numbers<[1], [0], [0], [1], [0, 0, 1, 1], [], []>} : vector<16x32xf32>, vector<32x32xf32>, vector<16x32xf32> -> vector<16x32xf32>
    %31 = vector.broadcast %15 : vector<1x32xf32> to vector<16x32xf32>
    %32 = arith.addf %30, %31 : vector<16x32xf32>
    %33 = vector.extract_strided_slice %26 {offsets = [0, 0], sizes = [16, 8], strides = [1, 1]} : vector<16x32xf32> to vector<16x8xf32>
    %34 = vector.extract_strided_slice %29 {offsets = [0, 0], sizes = [16, 8], strides = [1, 1]} : vector<16x32xf32> to vector<16x8xf32>
    %35 = vector.extract_strided_slice %32 {offsets = [0, 0], sizes = [16, 8], strides = [1, 1]} : vector<16x32xf32> to vector<16x8xf32>
    %36 = tpu.transpose %34, [1, 0] : vector<16x8xf32> -> vector<8x16xf32>
    %cst_21 = arith.constant dense<0.000000e+00> : vector<16x16xf32>
    %37 = tpu.matmul %33, %36, %cst_21 {dimension_numbers = #tpu.dot_dimension_numbers<[1], [0], [0], [1], [0, 0, 1, 1], [], []>} : vector<16x8xf32>, vector<8x16xf32>, vector<16x16xf32> -> vector<16x16xf32>
    %38 = arith.addf %37, %3 : vector<16x16xf32>
    %cst_22 = arith.constant dense<0xFF800000> : vector<16xf32>
    %39 = vector.multi_reduction <maximumf>, %38, %cst_22 [1] : vector<16x16xf32> to vector<16xf32>
    %40 = vector.shape_cast %39 : vector<16xf32> to vector<16x1xf32>
    %41 = vector.broadcast %40 : vector<16x1xf32> to vector<16x16xf32>
    %42 = arith.subf %38, %41 : vector<16x16xf32>
    %43 = math.exp %42 : vector<16x16xf32>
    %cst_23 = arith.constant dense<0.000000e+00> : vector<16xf32>
    %44 = vector.multi_reduction <add>, %43, %cst_23 [1] : vector<16x16xf32> to vector<16xf32>
    %45 = vector.shape_cast %44 : vector<16xf32> to vector<16x1xf32>
    %46 = vector.broadcast %45 : vector<16x1xf32> to vector<16x16xf32>
    %47 = arith.divf %43, %46 : vector<16x16xf32>
    %cst_24 = arith.constant dense<0.000000e+00> : vector<16x8xf32>
    %48 = tpu.matmul %47, %35, %cst_24 {dimension_numbers = #tpu.dot_dimension_numbers<[1], [0], [0], [1], [0, 0, 1, 1], [], []>} : vector<16x16xf32>, vector<16x8xf32>, vector<16x8xf32> -> vector<16x8xf32>
    %49 = vector.extract_strided_slice %26 {offsets = [0, 8], sizes = [16, 8], strides = [1, 1]} : vector<16x32xf32> to vector<16x8xf32>
    %50 = vector.extract_strided_slice %29 {offsets = [0, 8], sizes = [16, 8], strides = [1, 1]} : vector<16x32xf32> to vector<16x8xf32>
    %51 = vector.extract_strided_slice %32 {offsets = [0, 8], sizes = [16, 8], strides = [1, 1]} : vector<16x32xf32> to vector<16x8xf32>
    %52 = tpu.transpose %50, [1, 0] : vector<16x8xf32> -> vector<8x16xf32>
    %cst_25 = arith.constant dense<0.000000e+00> : vector<16x16xf32>
    %53 = tpu.matmul %49, %52, %cst_25 {dimension_numbers = #tpu.dot_dimension_numbers<[1], [0], [0], [1], [0, 0, 1, 1], [], []>} : vector<16x8xf32>, vector<8x16xf32>, vector<16x16xf32> -> vector<16x16xf32>
    %54 = arith.addf %53, %3 : vector<16x16xf32>
    %cst_26 = arith.constant dense<0xFF800000> : vector<16xf32>
    %55 = vector.multi_reduction <maximumf>, %54, %cst_26 [1] : vector<16x16xf32> to vector<16xf32>
    %56 = vector.shape_cast %55 : vector<16xf32> to vector<16x1xf32>
    %57 = vector.broadcast %56 : vector<16x1xf32> to vector<16x16xf32>
    %58 = arith.subf %54, %57 : vector<16x16xf32>
    %59 = math.exp %58 : vector<16x16xf32>
    %cst_27 = arith.constant dense<0.000000e+00> : vector<16xf32>
    %60 = vector.multi_reduction <add>, %59, %cst_27 [1] : vector<16x16xf32> to vector<16xf32>
    %61 = vector.shape_cast %60 : vector<16xf32> to vector<16x1xf32>
    %62 = vector.broadcast %61 : vector<16x1xf32> to vector<16x16xf32>
    %63 = arith.divf %59, %62 : vector<16x16xf32>
    %cst_28 = arith.constant dense<0.000000e+00> : vector<16x8xf32>
    %64 = tpu.matmul %63, %51, %cst_28 {dimension_numbers = #tpu.dot_dimension_numbers<[1], [0], [0], [1], [0, 0, 1, 1], [], []>} : vector<16x16xf32>, vector<16x8xf32>, vector<16x8xf32> -> vector<16x8xf32>
    %65 = vector.extract_strided_slice %26 {offsets = [0, 16], sizes = [16, 8], strides = [1, 1]} : vector<16x32xf32> to vector<16x8xf32>
    %66 = vector.extract_strided_slice %29 {offsets = [0, 16], sizes = [16, 8], strides = [1, 1]} : vector<16x32xf32> to vector<16x8xf32>
    %67 = vector.extract_strided_slice %32 {offsets = [0, 16], sizes = [16, 8], strides = [1, 1]} : vector<16x32xf32> to vector<16x8xf32>
    %68 = tpu.transpose %66, [1, 0] : vector<16x8xf32> -> vector<8x16xf32>
    %cst_29 = arith.constant dense<0.000000e+00> : vector<16x16xf32>
    %69 = tpu.matmul %65, %68, %cst_29 {dimension_numbers = #tpu.dot_dimension_numbers<[1], [0], [0], [1], [0, 0, 1, 1], [], []>} : vector<16x8xf32>, vector<8x16xf32>, vector<16x16xf32> -> vector<16x16xf32>
    %70 = arith.addf %69, %3 : vector<16x16xf32>
    %cst_30 = arith.constant dense<0xFF800000> : vector<16xf32>
    %71 = vector.multi_reduction <maximumf>, %70, %cst_30 [1] : vector<16x16xf32> to vector<16xf32>
    %72 = vector.shape_cast %71 : vector<16xf32> to vector<16x1xf32>
    %73 = vector.broadcast %72 : vector<16x1xf32> to vector<16x16xf32>
    %74 = arith.subf %70, %73 : vector<16x16xf32>
    %75 = math.exp %74 : vector<16x16xf32>
    %cst_31 = arith.constant dense<0.000000e+00> : vector<16xf32>
    %76 = vector.multi_reduction <add>, %75, %cst_31 [1] : vector<16x16xf32> to vector<16xf32>
    %77 = vector.shape_cast %76 : vector<16xf32> to vector<16x1xf32>
    %78 = vector.broadcast %77 : vector<16x1xf32> to vector<16x16xf32>
    %79 = arith.divf %75, %78 : vector<16x16xf32>
    %cst_32 = arith.constant dense<0.000000e+00> : vector<16x8xf32>
    %80 = tpu.matmul %79, %67, %cst_32 {dimension_numbers = #tpu.dot_dimension_numbers<[1], [0], [0], [1], [0, 0, 1, 1], [], []>} : vector<16x16xf32>, vector<16x8xf32>, vector<16x8xf32> -> vector<16x8xf32>
    %81 = vector.extract_strided_slice %26 {offsets = [0, 24], sizes = [16, 8], strides = [1, 1]} : vector<16x32xf32> to vector<16x8xf32>
    %82 = vector.extract_strided_slice %29 {offsets = [0, 24], sizes = [16, 8], strides = [1, 1]} : vector<16x32xf32> to vector<16x8xf32>
    %83 = vector.extract_strided_slice %32 {offsets = [0, 24], sizes = [16, 8], strides = [1, 1]} : vector<16x32xf32> to vector<16x8xf32>
    %84 = tpu.transpose %82, [1, 0] : vector<16x8xf32> -> vector<8x16xf32>
    %cst_33 = arith.constant dense<0.000000e+00> : vector<16x16xf32>
    %85 = tpu.matmul %81, %84, %cst_33 {dimension_numbers = #tpu.dot_dimension_numbers<[1], [0], [0], [1], [0, 0, 1, 1], [], []>} : vector<16x8xf32>, vector<8x16xf32>, vector<16x16xf32> -> vector<16x16xf32>
    %86 = arith.addf %85, %3 : vector<16x16xf32>
    %cst_34 = arith.constant dense<0xFF800000> : vector<16xf32>
    %87 = vector.multi_reduction <maximumf>, %86, %cst_34 [1] : vector<16x16xf32> to vector<16xf32>
    %88 = vector.shape_cast %87 : vector<16xf32> to vector<16x1xf32>
    %89 = vector.broadcast %88 : vector<16x1xf32> to vector<16x16xf32>
    %90 = arith.subf %86, %89 : vector<16x16xf32>
    %91 = math.exp %90 : vector<16x16xf32>
    %cst_35 = arith.constant dense<0.000000e+00> : vector<16xf32>
    %92 = vector.multi_reduction <add>, %91, %cst_35 [1] : vector<16x16xf32> to vector<16xf32>
    %93 = vector.shape_cast %92 : vector<16xf32> to vector<16x1xf32>
    %94 = vector.broadcast %93 : vector<16x1xf32> to vector<16x16xf32>
    %95 = arith.divf %91, %94 : vector<16x16xf32>
    %cst_36 = arith.constant dense<0.000000e+00> : vector<16x8xf32>
    %96 = tpu.matmul %95, %83, %cst_36 {dimension_numbers = #tpu.dot_dimension_numbers<[1], [0], [0], [1], [0, 0, 1, 1], [], []>} : vector<16x16xf32>, vector<16x8xf32>, vector<16x8xf32> -> vector<16x8xf32>
    %97 = tpu.concatenate %48, %64, %80, %96 in 1 : vector<16x8xf32>, vector<16x8xf32>, vector<16x8xf32>, vector<16x8xf32> -> vector<16x32xf32>
    %cst_37 = arith.constant dense<0.000000e+00> : vector<16x32xf32>
    %98 = tpu.matmul %97, %11, %cst_37 {dimension_numbers = #tpu.dot_dimension_numbers<[1], [0], [0], [1], [0, 0, 1, 1], [], []>} : vector<16x32xf32>, vector<32x32xf32>, vector<16x32xf32> -> vector<16x32xf32>
    %99 = vector.broadcast %16 : vector<1x32xf32> to vector<16x32xf32>
    %100 = arith.addf %98, %99 : vector<16x32xf32>
    %101 = arith.addf %0, %100 : vector<16x32xf32>
    %cst_38 = arith.constant dense<0.000000e+00> : vector<16xf32>
    %102 = vector.multi_reduction <add>, %101, %cst_38 [1] : vector<16x32xf32> to vector<16xf32>
    %103 = vector.shape_cast %102 : vector<16xf32> to vector<16x1xf32>
    %cst_39 = arith.constant 3.200000e+01 : f32
    %104 = vector.broadcast %cst_39 : f32 to vector<16x1xf32>
    %105 = arith.divf %103, %104 : vector<16x1xf32>
    %106 = vector.broadcast %105 : vector<16x1xf32> to vector<16x32xf32>
    %107 = arith.subf %101, %106 : vector<16x32xf32>
    %108 = arith.mulf %107, %107 : vector<16x32xf32>
    %cst_40 = arith.constant dense<0.000000e+00> : vector<16xf32>
    %109 = vector.multi_reduction <add>, %108, %cst_40 [1] : vector<16x32xf32> to vector<16xf32>
    %110 = vector.shape_cast %109 : vector<16xf32> to vector<16x1xf32>
    %cst_41 = arith.constant 3.200000e+01 : f32
    %111 = vector.broadcast %cst_41 : f32 to vector<16x1xf32>
    %112 = arith.divf %110, %111 : vector<16x1xf32>
    %113 = vector.broadcast %105 : vector<16x1xf32> to vector<16x32xf32>
    %114 = arith.subf %101, %113 : vector<16x32xf32>
    %cst_42 = arith.constant 9.99999997E-7 : f32
    %115 = vector.broadcast %cst_42 : f32 to vector<16x1xf32>
    %116 = arith.addf %112, %115 : vector<16x1xf32>
    %117 = math.rsqrt %116 : vector<16x1xf32>
    %118 = vector.broadcast %117 : vector<16x1xf32> to vector<16x32xf32>
    %119 = arith.mulf %114, %118 : vector<16x32xf32>
    %120 = vector.broadcast %17 : vector<1x32xf32> to vector<16x32xf32>
    %121 = arith.mulf %119, %120 : vector<16x32xf32>
    %122 = vector.broadcast %18 : vector<1x32xf32> to vector<16x32xf32>
    %123 = arith.addf %121, %122 : vector<16x32xf32>
    %c0_43 = arith.constant 0 : index
    %c0_44 = arith.constant 0 : index
    %124 = vector.load %arg7[%c0_43, %c0_44] : memref<32x128xf32, #tpu.memory_space<vmem>>, vector<32x128xf32>
    %cst_45 = arith.constant dense<0.000000e+00> : vector<16x128xf32>
    %125 = tpu.matmul %123, %124, %cst_45 {dimension_numbers = #tpu.dot_dimension_numbers<[1], [0], [0], [1], [0, 0, 1, 1], [], []>} : vector<16x32xf32>, vector<32x128xf32>, vector<16x128xf32> -> vector<16x128xf32>
    %c0_46 = arith.constant 0 : index
    %c0_47 = arith.constant 0 : index
    %126 = vector.load %arg8[%c0_46, %c0_47] : memref<1x128xf32, #tpu.memory_space<vmem>>, vector<1x128xf32>
    %127 = vector.broadcast %126 : vector<1x128xf32> to vector<16x128xf32>
    %128 = arith.addf %125, %127 : vector<16x128xf32>
    %cst_48 = arith.constant 0.000000e+00 : f32
    %129 = vector.broadcast %cst_48 : f32 to vector<16x128xf32>
    %130 = arith.maximumf %128, %129 : vector<16x128xf32>
    %c0_49 = arith.constant 0 : index
    %c0_50 = arith.constant 0 : index
    %131 = vector.load %arg9[%c0_49, %c0_50] : memref<128x32xf32, #tpu.memory_space<vmem>>, vector<128x32xf32>
    %cst_51 = arith.constant dense<0.000000e+00> : vector<16x32xf32>
    %132 = tpu.matmul %130, %131, %cst_51 {dimension_numbers = #tpu.dot_dimension_numbers<[1], [0], [0], [1], [0, 0, 1, 1], [], []>} : vector<16x128xf32>, vector<128x32xf32>, vector<16x32xf32> -> vector<16x32xf32>
    %133 = vector.broadcast %19 : vector<1x32xf32> to vector<16x32xf32>
    %134 = arith.addf %132, %133 : vector<16x32xf32>
    %135 = arith.addf %123, %134 : vector<16x32xf32>
    %cst_52 = arith.constant dense<0.000000e+00> : vector<16xf32>
    %136 = vector.multi_reduction <add>, %135, %cst_52 [1] : vector<16x32xf32> to vector<16xf32>
    %137 = vector.shape_cast %136 : vector<16xf32> to vector<16x1xf32>
    %cst_53 = arith.constant 3.200000e+01 : f32
    %138 = vector.broadcast %cst_53 : f32 to vector<16x1xf32>
    %139 = arith.divf %137, %138 : vector<16x1xf32>
    %140 = vector.broadcast %139 : vector<16x1xf32> to vector<16x32xf32>
    %141 = arith.subf %135, %140 : vector<16x32xf32>
    %142 = arith.mulf %141, %141 : vector<16x32xf32>
    %cst_54 = arith.constant dense<0.000000e+00> : vector<16xf32>
    %143 = vector.multi_reduction <add>, %142, %cst_54 [1] : vector<16x32xf32> to vector<16xf32>
    %144 = vector.shape_cast %143 : vector<16xf32> to vector<16x1xf32>
    %cst_55 = arith.constant 3.200000e+01 : f32
    %145 = vector.broadcast %cst_55 : f32 to vector<16x1xf32>
    %146 = arith.divf %144, %145 : vector<16x1xf32>
    %147 = vector.broadcast %139 : vector<16x1xf32> to vector<16x32xf32>
    %148 = arith.subf %135, %147 : vector<16x32xf32>
    %cst_56 = arith.constant 9.99999997E-7 : f32
    %149 = vector.broadcast %cst_56 : f32 to vector<16x1xf32>
    %150 = arith.addf %146, %149 : vector<16x1xf32>
    %151 = math.rsqrt %150 : vector<16x1xf32>
    %152 = vector.broadcast %151 : vector<16x1xf32> to vector<16x32xf32>
    %153 = arith.mulf %148, %152 : vector<16x32xf32>
    %154 = vector.broadcast %20 : vector<1x32xf32> to vector<16x32xf32>
    %155 = arith.mulf %153, %154 : vector<16x32xf32>
    %156 = vector.broadcast %21 : vector<1x32xf32> to vector<16x32xf32>
    %157 = arith.addf %155, %156 : vector<16x32xf32>
    %c0_57 = arith.constant 0 : index
    %c0_58 = arith.constant 0 : index
    %158 = vector.load %arg10[%c0_57, %c0_58] : memref<16x32xf32, #tpu.memory_space<vmem>>, vector<16x32xf32>
    tpu.vector_store %arg10[%c0_57, %c0_58], %157 {strides = array<i32>} : memref<16x32xf32, #tpu.memory_space<vmem>>, vector<16x32xf32>,
    return
  }
  func.func @transform_0(%arg0: i32) -> (i32, i32) {
    %c0_i32 = arith.constant 0 : i32
    %c0_i32_0 = arith.constant 0 : i32
    %c0_i32_1 = arith.constant 0 : i32
    return %c0_i32, %c0_i32_0 : i32, i32
  }
  func.func @transform_1(%arg0: i32) -> (i32, i32) {
    %c0_i32 = arith.constant 0 : i32
    %c0_i32_0 = arith.constant 0 : i32
    %c0_i32_1 = arith.constant 0 : i32
    return %c0_i32, %c0_i32_0 : i32, i32
  }
  func.func @transform_2(%arg0: i32) -> (i32, i32) {
    %c0_i32 = arith.constant 0 : i32
    %c0_i32_0 = arith.constant 0 : i32
    %c0_i32_1 = arith.constant 0 : i32
    return %c0_i32, %c0_i32_0 : i32, i32
  }
  func.func @transform_3(%arg0: i32) -> (i32, i32) {
    %c0_i32 = arith.constant 0 : i32
    %c0_i32_0 = arith.constant 0 : i32
    %c0_i32_1 = arith.constant 0 : i32
    return %c0_i32, %c0_i32_0 : i32, i32
  }
  func.func @transform_4(%arg0: i32) -> (i32, i32, i32) {
    %c0_i32 = arith.constant 0 : i32
    %c0_i32_0 = arith.constant 0 : i32
    %c0_i32_1 = arith.constant 0 : i32
    %c0_i32_2 = arith.constant 0 : i32
    return %c0_i32, %c0_i32_0, %c0_i32_1 : i32, i32, i32
  }
  func.func @transform_5(%arg0: i32) -> (i32, i32) {
    %c0_i32 = arith.constant 0 : i32
    %c0_i32_0 = arith.constant 0 : i32
    %c0_i32_1 = arith.constant 0 : i32
    return %c0_i32, %c0_i32_0 : i32, i32
  }
  func.func @transform_6(%arg0: i32) -> (i32, i32) {
    %c0_i32 = arith.constant 0 : i32
    %c0_i32_0 = arith.constant 0 : i32
    %c0_i32_1 = arith.constant 0 : i32
    return %c0_i32, %c0_i32_0 : i32, i32
  }
  func.func @transform_7(%arg0: i32) -> (i32, i32) {
    %c0_i32 = arith.constant 0 : i32
    %c0_i32_0 = arith.constant 0 : i32
    %c0_i32_1 = arith.constant 0 : i32
    return %c0_i32, %c0_i32_0 : i32, i32
  }
  func.func @transform_8(%arg0: i32) -> (i32, i32) {
    %c0_i32 = arith.constant 0 : i32
    %c0_i32_0 = arith.constant 0 : i32
    %c0_i32_1 = arith.constant 0 : i32
    return %c0_i32, %c0_i32_0 : i32, i32
  }
  func.func @transform_9(%arg0: i32) -> (i32, i32) {
    %c0_i32 = arith.constant 0 : i32
    %c0_i32_0 = arith.constant 0 : i32
    %c0_i32_1 = arith.constant 0 : i32
    return %c0_i32, %c0_i32_0 : i32, i32
  }
}

</mosaic_0001>

<llo_original>
// kernel: tpu_custom_call.1
$region0: #{tpu_custom_call.1}
  #allocation0 [shape = 'u32[]', space=smem, size = 0x4, offset = 0x4, fixed_abs, tag = 'smem constant byte address 0x4 - core index']
  #allocation1 [shape = 'u32[72,128]{1,0:T(1,128)}', space=vmem, size = 0x9000, scoped, tag = 'internal scratch']
  %s0 = inlined_call_operand.hbm [shape: f32[16,32], index: 0, kind: input, shape index: {}]
  %s1 = inlined_call_operand.hbm [shape: f32[16,32], index: 1, kind: input, shape index: {}]
  %s2 = inlined_call_operand.hbm [shape: f32[16,32], index: 2, kind: input, shape index: {}]
  %s3 = inlined_call_operand.hbm [shape: f32[16,16], index: 3, kind: input, shape index: {}]
  %s4 = inlined_call_operand.vmem [shape: f32[4,32,32], index: 4, kind: input, shape index: {}]
  %s5 = inlined_call_operand.hbm [shape: f32[9,32], index: 5, kind: input, shape index: {}]
  %s6 = inlined_call_operand.vmem [shape: f32[32,128], index: 6, kind: input, shape index: {}]
  %s7 = inlined_call_operand.vmem [shape: f32[1,128], index: 7, kind: input, shape index: {}]
  %s8 = inlined_call_operand.vmem [shape: f32[128,32], index: 8, kind: input, shape index: {}]
  %s9 = inlined_call_operand.hbm [shape: f32[16,32], index: 9, kind: output, shape index: {}]
  %s10 = sld [smem:[#allocation0]]
  $region66: #{tpu_custom_call.1} parent=0
    _
  %s12 = ssub.s32 1, %s10
  %s13 = scalar_select 0, %s12, %s10
  $region1: #{tpu_custom_call.1} parent=0
    #allocation2 [shape = 'u8[8192]{0}', space=vmem, size = 0x2000, scoped, tag = 'input window, operand 0, single buffered']
    #allocation3 [shape = 's32[1]{0}', space=sflag, size = 0x4, scoped, tag = 'scoped memory for tpu_custom_call.1']
    #allocation4 [shape = 's32[1]{0}', space=sflag, size = 0x4, scoped, tag = 'scoped memory for tpu_custom_call.1']
    #allocation5 [shape = 'u8[8192]{0}', space=vmem, size = 0x2000, scoped, tag = 'input window, operand 1, single buffered']
    #allocation6 [shape = 's32[1]{0}', space=sflag, size = 0x4, scoped, tag = 'scoped memory for tpu_custom_call.1']
    #allocation7 [shape = 'u8[8192]{0}', space=vmem, size = 0x2000, scoped, tag = 'input window, operand 2, single buffered']
    #allocation8 [shape = 'u8[8192]{0}', space=vmem, size = 0x2000, scoped, tag = 'input window, operand 3, single buffered']
    #allocation9 [shape = 's32[1]{0}', space=sflag, size = 0x4, scoped, tag = 'scoped memory for tpu_custom_call.1']
    #allocation10 [shape = 'u8[8192]{0}', space=vmem, size = 0x2000, scoped, tag = 'input window, operand 5, single buffered']
    #allocation11 [shape = 'u8[8192]{0}', space=vmem, size = 0x2000, scoped, tag = 'output window, operand 0, single buffered']
    %14 = vsyncpa [#allocation3], 0
    %15 = vsyncpa [#allocation6], 0
    %16 = vsyncpa [#allocation9], 0
    %17 = vsyncpa [#allocation4], 0
    // Predicated region
    $region2: #{tpu_custom_call.1} parent=1 // pred_check
      _
    $region3: #{tpu_custom_call.1} parent=1 // pred_check_branch
      %19 = sbr.rel (0) target = $region5
    $region4: #{tpu_custom_call.1} parent=1 // pred_region
      %21 = vsyncadd [#allocation3], 0
      %s22 = sshll.u32 %s0, 4
      %s23 = int_to_ptr.hbm [resolvable:$true] %s22
      %s24 = sshll.u32 [#allocation2], 4
      %s25 = int_to_ptr.vmem [resolvable:$true] %s24
      %30 = dma.hbm_to_vmem [thread:$0]  %s23, 256, %s25, [#allocation3], 128, 128, 8
    $region5: #{tpu_custom_call.1} parent=1 // pred_fallthru
      _
    // Predicated region
    $region6: #{tpu_custom_call.1} parent=1 // pred_check
      _
    $region7: #{tpu_custom_call.1} parent=1 // pred_check_branch
      %32 = sbr.rel (0) target = $region9
    $region8: #{tpu_custom_call.1} parent=1 // pred_region
      %34 = vsyncadd [#allocation6], 0
      %s35 = sshll.u32 %s1, 4
      %s36 = int_to_ptr.hbm [resolvable:$true] %s35
      %s37 = sshll.u32 [#allocation5], 4
      %s38 = int_to_ptr.vmem [resolvable:$true] %s37
      %43 = dma.hbm_to_vmem [thread:$0]  %s36, 256, %s38, [#allocation6], 128, 128, 8
    $region9: #{tpu_custom_call.1} parent=1 // pred_fallthru
      _
    // Predicated region
    $region10: #{tpu_custom_call.1} parent=1 // pred_check
      _
    $region11: #{tpu_custom_call.1} parent=1 // pred_check_branch
      %45 = sbr.rel (0) target = $region13
    $region12: #{tpu_custom_call.1} parent=1 // pred_region
      %47 = vsyncadd [#allocation6], 0
      %s48 = sshll.u32 %s2, 4
      %s49 = int_to_ptr.hbm [resolvable:$true] %s48
      %s50 = sshll.u32 [#allocation7], 4
      %s51 = int_to_ptr.vmem [resolvable:$true] %s50
      %56 = dma.hbm_to_vmem [thread:$0]  %s49, 256, %s51, [#allocation6], 128, 128, 8
    $region13: #{tpu_custom_call.1} parent=1 // pred_fallthru
      _
    // Predicated region
    $region14: #{tpu_custom_call.1} parent=1 // pred_check
      _
    $region15: #{tpu_custom_call.1} parent=1 // pred_check_branch
      %58 = sbr.rel (0) target = $region17
    $region16: #{tpu_custom_call.1} parent=1 // pred_region
      %60 = vsyncadd [#allocation9], 0
      %s61 = sshll.u32 %s3, 4
      %s62 = int_to_ptr.hbm [resolvable:$true] %s61
      %s63 = sshll.u32 [#allocation8], 4
      %s64 = int_to_ptr.vmem [resolvable:$true] %s63
      %69 = dma.hbm_to_vmem [thread:$0]  %s62, 256, %s64, [#allocation9], 128, 128, 8
    $region17: #{tpu_custom_call.1} parent=1 // pred_fallthru
      _
    // Predicated region
    $region18: #{tpu_custom_call.1} parent=1 // pred_check
      _
    $region19: #{tpu_custom_call.1} parent=1 // pred_check_branch
      %71 = sbr.rel (0) target = $region21
    $region20: #{tpu_custom_call.1} parent=1 // pred_region
      _
    $region21: #{tpu_custom_call.1} parent=1 // pred_fallthru
      _
    // Predicated region
    $region22: #{tpu_custom_call.1} parent=1 // pred_check
      _
    $region23: #{tpu_custom_call.1} parent=1 // pred_check_branch
      %73 = sbr.rel (0) target = $region25
    $region24: #{tpu_custom_call.1} parent=1 // pred_region
      %75 = vsyncadd [#allocation9], 0
      %s76 = sshll.u32 %s5, 4
      %s77 = int_to_ptr.hbm [resolvable:$true] %s76
      %s78 = sshll.u32 [#allocation10], 4
      %s79 = int_to_ptr.vmem [resolvable:$true] %s78
      %84 = dma.hbm_to_vmem [thread:$0]  %s77, 256, %s79, [#allocation9], 128, 128, 8
    $region25: #{tpu_custom_call.1} parent=1 // pred_fallthru
      _
    // Predicated region
    $region26: #{tpu_custom_call.1} parent=1 // pred_check
      _
    $region27: #{tpu_custom_call.1} parent=1 // pred_check_branch
      %86 = sbr.rel (0) target = $region29
    $region28: #{tpu_custom_call.1} parent=1 // pred_region
      _
    $region29: #{tpu_custom_call.1} parent=1 // pred_fallthru
      _
    // Predicated region
    $region30: #{tpu_custom_call.1} parent=1 // pred_check
      _
    $region31: #{tpu_custom_call.1} parent=1 // pred_check_branch
      %88 = sbr.rel (0) target = $region33
    $region32: #{tpu_custom_call.1} parent=1 // pred_region
      _
    $region33: #{tpu_custom_call.1} parent=1 // pred_fallthru
      _
    // Predicated region
    $region34: #{tpu_custom_call.1} parent=1 // pred_check
      _
    $region35: #{tpu_custom_call.1} parent=1 // pred_check_branch
      %90 = sbr.rel (0) target = $region37
    $region36: #{tpu_custom_call.1} parent=1 // pred_region
      _
    $region37: #{tpu_custom_call.1} parent=1 // pred_fallthru
      _
    // Predicated region
    $region38: #{tpu_custom_call.1} parent=1 // pred_check
      _
    $region39: #{tpu_custom_call.1} parent=1 // pred_check_branch
      %92 = sbr.rel (0) target = $region41
    $region40: #{tpu_custom_call.1} parent=1 // pred_region
      %94 = dma.done [#allocation3], 256
    $region41: #{tpu_custom_call.1} parent=1 // pred_fallthru
      _
    // Predicated region
    $region42: #{tpu_custom_call.1} parent=1 // pred_check
      _
    $region43: #{tpu_custom_call.1} parent=1 // pred_check_branch
      %96 = sbr.rel (0) target = $region45
    $region44: #{tpu_custom_call.1} parent=1 // pred_region
      %98 = dma.done [#allocation6], 256
    $region45: #{tpu_custom_call.1} parent=1 // pred_fallthru
      _
    // Predicated region
    $region46: #{tpu_custom_call.1} parent=1 // pred_check
      _
    $region47: #{tpu_custom_call.1} parent=1 // pred_check_branch
      %100 = sbr.rel (0) target = $region49
    $region48: #{tpu_custom_call.1} parent=1 // pred_region
      %102 = dma.done [#allocation6], 256
    $region49: #{tpu_custom_call.1} parent=1 // pred_fallthru
      _
    // Predicated region
    $region50: #{tpu_custom_call.1} parent=1 // pred_check
      _
    $region51: #{tpu_custom_call.1} parent=1 // pred_check_branch
      %104 = sbr.rel (0) target = $region53
    $region52: #{tpu_custom_call.1} parent=1 // pred_region
      %106 = dma.done [#allocation9], 256
    $region53: #{tpu_custom_call.1} parent=1 // pred_fallthru
      _
    // Predicated region
    $region54: #{tpu_custom_call.1} parent=1 // pred_check
      _
    $region55: #{tpu_custom_call.1} parent=1 // pred_check_branch
      %108 = sbr.rel (0) target = $region57
    $region56: #{tpu_custom_call.1} parent=1 // pred_region
      %110 = dma.done [#allocation9], 256
    $region57: #{tpu_custom_call.1} parent=1 // pred_fallthru
      _
    %v111 = vld [vmem:[#allocation2] sm:$0xff]
    %v112 = vld [vmem:[#allocation2 + $0x8] sm:$0xff]
    %v113 = vld [vmem:[#allocation5] sm:$0xff]
    %v114 = vld [vmem:[#allocation5 + $0x8] sm:$0xff]
    %v115 = vld [vmem:[#allocation7] sm:$0xff]
    %v116 = vld [vmem:[#allocation7 + $0x8] sm:$0xff]
    %v117 = vld [vmem:[#allocation8] sm:$0xff]
    %v118 = vld [vmem:[#allocation8 + $0x8] sm:$0xff]
    %v119 = vld [vmem:[%s4] sm:$0xff]
    %v120 = vld [vmem:[%s4 + $0x8] sm:$0xff]
    %v121 = vld [vmem:[%s4 + $0x10] sm:$0xff]
    %v122 = vld [vmem:[%s4 + $0x18] sm:$0xff]
    %s123 = scalar_lea.vmem %s4, 32
    %v124 = vld [vmem:[%s123] sm:$0xff]
    %v125 = vld [vmem:[%s123 + $0x8] sm:$0xff]
    %v126 = vld [vmem:[%s123 + $0x10] sm:$0xff]
    %v127 = vld [vmem:[%s123 + $0x18] sm:$0xff]
    %s128 = scalar_lea.vmem %s4, 64
    %v129 = vld [vmem:[%s128] sm:$0xff]
    %v130 = vld [vmem:[%s128 + $0x8] sm:$0xff]
    %v131 = vld [vmem:[%s128 + $0x10] sm:$0xff]
    %v132 = vld [vmem:[%s128 + $0x18] sm:$0xff]
    %s133 = scalar_lea.vmem %s4, 96
    %v134 = vld [vmem:[%s133] sm:$0xff]
    %v135 = vld [vmem:[%s133 + $0x8] sm:$0xff]
    %v136 = vld [vmem:[%s133 + $0x10] sm:$0xff]
    %v137 = vld [vmem:[%s133 + $0x18] sm:$0xff]
    %v138 = vld [vmem:[#allocation10] sm:$0xff]
    %v139 = vld [vmem:[#allocation10 + $0x8] sm:$0x1]
    %v140 = vperm.slane %v138, 0
    %vm141 = vcmask 261120
    %v143 = vsel %vm141, %v111, 0
    %v146 = vsel %vm141, %v112, 0
    %148 = vmatpush.msra.mxu0 0.0
    %149 = vmatpush.msra.mxu0 0.0
    %150 = vmatpush.msra.mxu0 0.0
    %151 = vmatpush.msra.mxu0 0.0
    %152 = vmatpush.msra.mxu0 0.0
    %153 = vmatpush.msra.mxu0 0.0
    %154 = vmatpush.msra.mxu0 0.0
    %155 = vmatpush.msra.mxu0 0.0
    %156 = vmatpush.msra.mxu0 0.0
    %157 = vmatpush.msra.mxu0 0.0
    %158 = vmatpush.msra.mxu0 0.0
    %159 = vmatpush.msra.mxu0 0.0
    %160 = vmatpush.msra.mxu0 %v122
    %161 = vmatpush.msra.mxu0 %v121
    %162 = vmatpush.msra.mxu0 %v120
    %163 = vmatpush.msra.mxu0 %v119
    %164 = vmatmul.f32.gmra.mxu0 %v143
    %v165 = vpop.f32.mrf.mxu0
    %v166 = vadd.f32 %v140, %v165
    %167 = vmatmul.f32.gmra.mxu0 %v146
    %v168 = vpop.f32.mrf.mxu0
    %v169 = vadd.f32 %v140, %v168
    %170 = vdwg.mxu0
    %v171 = vmul.f32 %v166, 0.35355338
    %v172 = vmul.f32 %v169, 0.35355338
    %v173 = vperm.slane %v138, 1
    %v175 = vsel %vm141, %v113, 0
    %v178 = vsel %vm141, %v114, 0
    %180 = vmatpush.msra.mxu0 0.0
    %181 = vmatpush.msra.mxu0 0.0
    %182 = vmatpush.msra.mxu0 0.0
    %183 = vmatpush.msra.mxu0 0.0
    %184 = vmatpush.msra.mxu0 0.0
    %185 = vmatpush.msra.mxu0 0.0
    %186 = vmatpush.msra.mxu0 0.0
    %187 = vmatpush.msra.mxu0 0.0
    %188 = vmatpush.msra.mxu0 0.0
    %189 = vmatpush.msra.mxu0 0.0
    %190 = vmatpush.msra.mxu0 0.0
    %191 = vmatpush.msra.mxu0 0.0
    %192 = vmatpush.msra.mxu0 %v127
    %193 = vmatpush.msra.mxu0 %v126
    %194 = vmatpush.msra.mxu0 %v125
    %195 = vmatpush.msra.mxu0 %v124
    %196 = vmatmul.f32.gmra.mxu0 %v175
    %v197 = vpop.f32.mrf.mxu0
    %v198 = vadd.f32 %v173, %v197
    %199 = vmatmul.f32.gmra.mxu0 %v178
    %v200 = vpop.f32.mrf.mxu0
    %v201 = vadd.f32 %v173, %v200
    %202 = vdwg.mxu0
    %v203 = vperm.slane %v138, 2
    %v205 = vsel %vm141, %v115, 0
    %v208 = vsel %vm141, %v116, 0
    %210 = vmatpush.msra.mxu0 0.0
    %211 = vmatpush.msra.mxu0 0.0
    %212 = vmatpush.msra.mxu0 0.0
    %213 = vmatpush.msra.mxu0 0.0
    %214 = vmatpush.msra.mxu0 0.0
    %215 = vmatpush.msra.mxu0 0.0
    %216 = vmatpush.msra.mxu0 0.0
    %217 = vmatpush.msra.mxu0 0.0
    %218 = vmatpush.msra.mxu0 0.0
    %219 = vmatpush.msra.mxu0 0.0
    %220 = vmatpush.msra.mxu0 0.0
    %221 = vmatpush.msra.mxu0 0.0
    %222 = vmatpush.msra.mxu0 %v132
    %223 = vmatpush.msra.mxu0 %v131
    %224 = vmatpush.msra.mxu0 %v130
    %225 = vmatpush.msra.mxu0 %v129
    %226 = vmatmul.f32.gmra.mxu0 %v205
    %v227 = vpop.f32.mrf.mxu0
    %v228 = vadd.f32 %v203, %v227
    %229 = vmatmul.f32.gmra.mxu0 %v208
    %v230 = vpop.f32.mrf.mxu0
    %v231 = vadd.f32 %v203, %v230
    %232 = vdwg.mxu0
    %vm233 = vcmask 64512
    %v235 = vsel %vm233, %v171, 0
    %v238 = vsel %vm233, %v172, 0
    %v241 = vsel %vm233, %v198, 0
    %v244 = vsel %vm233, %v201, 0
    %246 = vmatpush.xpose.msra.mxu0 0.0
    %247 = vmatpush.xpose.msra.mxu0 0.0
    %248 = vmatpush.xpose.msra.mxu0 0.0
    %249 = vmatpush.xpose.msra.mxu0 0.0
    %250 = vmatpush.xpose.msra.mxu0 0.0
    %251 = vmatpush.xpose.msra.mxu0 0.0
    %252 = vmatpush.xpose.msra.mxu0 0.0
    %253 = vmatpush.xpose.msra.mxu0 0.0
    %254 = vmatpush.xpose.msra.mxu0 0.0
    %255 = vmatpush.xpose.msra.mxu0 0.0
    %256 = vmatpush.xpose.msra.mxu0 0.0
    %257 = vmatpush.xpose.msra.mxu0 0.0
    %258 = vmatpush.xpose.msra.mxu0 0.0
    %259 = vmatpush.xpose.msra.mxu0 0.0
    %260 = vmatpush.xpose.msra.mxu0 %v244
    %261 = vmatpush.xpose.msra.mxu0 %v241
    %262 = vmatmul.f32.gmra.mxu0 %v235
    %v263 = vpop.f32.mrf.mxu0
    %v264 = vadd.f32 %v117, %v263
    %265 = vmatmul.f32.gmra.mxu0 %v238
    %v266 = vpop.f32.mrf.mxu0
    %v267 = vadd.f32 %v118, %v266
    %268 = vdwg.mxu0
    %vm269 = vcmask 130048
    %v270 = vsel %vm269, %v264, -inf
    %271 = vmax.xlane.f32.xlu0 %v270
    %v272 = vpop.xlane.xlu0 %271
    %v273 = vsel %vm269, %v267, -inf
    %274 = vmax.xlane.f32.xlu0 %v273
    %v275 = vpop.xlane.xlu0 %274
    %v276 = vsub.f32 %v264, %v272
    %v277 = vsub.f32 %v267, %v275
    %v278 = vmul.f32 %v276, 1.442695
    %v279 = vpow.pop %v278
    %v280 = vmul.f32 %v277, 1.442695
    %v281 = vpow.pop %v280
    %v282 = vsel %vm269, %v279, 0.0
    %283 = vadd.xlane.f32.xlu0 %v282
    %v284 = vpop.xlane.xlu0 %283
    %v285 = vsel %vm269, %v281, 0.0
    %286 = vadd.xlane.f32.xlu0 %v285
    %v287 = vpop.xlane.xlu0 %286
    %v288 = vrcp.pop %v284
    %v289 = vmul.f32 %v284, %v288
    %v290 = vsub.f32 1.0, %v289
    %v291 = vmul.f32 %v288, %v290
    %v292 = vadd.f32 %v288, %v291
    %vm293 = vweird.f32 %v284
    %vm294 = vweird.f32 %v288
    %vm295 = vmor %vm293, %vm294
    %v296 = vsel %vm295, %v288, %v292
    %v297 = vand.u32 2147483647, %v284
    %vm298 = vcmp.eq.f32.partialorder %v297, 8.507059e+37
    %v299 = vand.u32 %v284, 2147483648
    %v300 = vor.u32 1.1754944e-38, %v299
    %v301 = vsel %vm298, %v300, %v296
    %v302 = vmul.f32 %v279, %v301
    %v303 = vrcp.pop %v287
    %v304 = vmul.f32 %v287, %v303
    %v305 = vsub.f32 1.0, %v304
    %v306 = vmul.f32 %v303, %v305
    %v307 = vadd.f32 %v303, %v306
    %vm308 = vweird.f32 %v287
    %vm309 = vweird.f32 %v303
    %vm310 = vmor %vm308, %vm309
    %v311 = vsel %vm310, %v303, %v307
    %v312 = vand.u32 2147483647, %v287
    %vm313 = vcmp.eq.f32.partialorder %v312, 8.507059e+37
    %v314 = vand.u32 %v287, 2147483648
    %v315 = vor.u32 1.1754944e-38, %v314
    %v316 = vsel %vm313, %v315, %v311
    %v317 = vmul.f32 %v281, %v316
    %v319 = vsel %vm269, %v302, 0
    %v322 = vsel %vm269, %v317, 0
    %324 = vmatpush.msra.mxu0 0.0
    %325 = vmatpush.msra.mxu0 0.0
    %326 = vmatpush.msra.mxu0 0.0
    %327 = vmatpush.msra.mxu0 0.0
    %328 = vmatpush.msra.mxu0 0.0
    %329 = vmatpush.msra.mxu0 0.0
    %330 = vmatpush.msra.mxu0 0.0
    %331 = vmatpush.msra.mxu0 0.0
    %332 = vmatpush.msra.mxu0 0.0
    %333 = vmatpush.msra.mxu0 0.0
    %334 = vmatpush.msra.mxu0 0.0
    %335 = vmatpush.msra.mxu0 0.0
    %336 = vmatpush.msra.mxu0 0.0
    %337 = vmatpush.msra.mxu0 0.0
    %338 = vmatpush.msra.mxu0 %v231
    %339 = vmatpush.msra.mxu0 %v228
    %340 = vmatmul.f32.gmra.mxu0 %v319
    %v341 = vpop.f32.mrf.mxu0
    %v342 = vadd.f32 0.0, %v341
    %343 = vmatmul.f32.gmra.mxu0 %v322
    %v344 = vpop.f32.mrf.mxu0
    %v345 = vadd.f32 0.0, %v344
    %346 = vdwg.mxu0
    %347 = vrot.lane.b32.xlu0 %v171, 120
    %v348 = vpop.permute.xlu0 %347
    %349 = vrot.lane.b32.xlu0 %v172, 120
    %v350 = vpop.permute.xlu0 %349
    %351 = vrot.lane.b32.xlu0 %v198, 120
    %v352 = vpop.permute.xlu0 %351
    %353 = vrot.lane.b32.xlu0 %v201, 120
    %v354 = vpop.permute.xlu0 %353
    %v355 = vsel %vm233, %v348, 0
    %v357 = vsel %vm233, %v350, 0
    %v359 = vsel %vm233, %v352, 0
    %v361 = vsel %vm233, %v354, 0
    %363 = vmatpush.xpose.msra.mxu0 0.0
    %364 = vmatpush.xpose.msra.mxu0 0.0
    %365 = vmatpush.xpose.msra.mxu0 0.0
    %366 = vmatpush.xpose.msra.mxu0 0.0
    %367 = vmatpush.xpose.msra.mxu0 0.0
    %368 = vmatpush.xpose.msra.mxu0 0.0
    %369 = vmatpush.xpose.msra.mxu0 0.0
    %370 = vmatpush.xpose.msra.mxu0 0.0
    %371 = vmatpush.xpose.msra.mxu0 0.0
    %372 = vmatpush.xpose.msra.mxu0 0.0
    %373 = vmatpush.xpose.msra.mxu0 0.0
    %374 = vmatpush.xpose.msra.mxu0 0.0
    %375 = vmatpush.xpose.msra.mxu0 0.0
    %376 = vmatpush.xpose.msra.mxu0 0.0
    %377 = vmatpush.xpose.msra.mxu0 %v361
    %378 = vmatpush.xpose.msra.mxu0 %v359
    %379 = vmatmul.f32.gmra.mxu0 %v355
    %v380 = vpop.f32.mrf.mxu0
    %v381 = vadd.f32 %v117, %v380
    %382 = vmatmul.f32.gmra.mxu0 %v357
    %v383 = vpop.f32.mrf.mxu0
    %v384 = vadd.f32 %v118, %v383
    %385 = vdwg.mxu0
    %v386 = vsel %vm269, %v381, -inf
    %387 = vmax.xlane.f32.xlu0 %v386
    %v388 = vpop.xlane.xlu0 %387
    %v389 = vsel %vm269, %v384, -inf
    %390 = vmax.xlane.f32.xlu0 %v389
    %v391 = vpop.xlane.xlu0 %390
    %v392 = vsub.f32 %v381, %v388
    %v393 = vsub.f32 %v384, %v391
    %v394 = vmul.f32 %v392, 1.442695
    %v395 = vpow.pop %v394
    %v396 = vmul.f32 %v393, 1.442695
    %v397 = vpow.pop %v396
    %v398 = vsel %vm269, %v395, 0.0
    %399 = vadd.xlane.f32.xlu0 %v398
    %v400 = vpop.xlane.xlu0 %399
    %v401 = vsel %vm269, %v397, 0.0
    %402 = vadd.xlane.f32.xlu0 %v401
    %v403 = vpop.xlane.xlu0 %402
    %v404 = vrcp.pop %v400
    %v405 = vmul.f32 %v400, %v404
    %v406 = vsub.f32 1.0, %v405
    %v407 = vmul.f32 %v404, %v406
    %v408 = vadd.f32 %v404, %v407
    %vm409 = vweird.f32 %v400
    %vm410 = vweird.f32 %v404
    %vm411 = vmor %vm409, %vm410
    %v412 = vsel %vm411, %v404, %v408
    %v413 = vand.u32 2147483647, %v400
    %vm414 = vcmp.eq.f32.partialorder %v413, 8.507059e+37
    %v415 = vand.u32 %v400, 2147483648
    %v416 = vor.u32 1.1754944e-38, %v415
    %v417 = vsel %vm414, %v416, %v412
    %v418 = vmul.f32 %v395, %v417
    %v419 = vrcp.pop %v403
    %v420 = vmul.f32 %v403, %v419
    %v421 = vsub.f32 1.0, %v420
    %v422 = vmul.f32 %v419, %v421
    %v423 = vadd.f32 %v419, %v422
    %vm424 = vweird.f32 %v403
    %vm425 = vweird.f32 %v419
    %vm426 = vmor %vm424, %vm425
    %v427 = vsel %vm426, %v419, %v423
    %v428 = vand.u32 2147483647, %v403
    %vm429 = vcmp.eq.f32.partialorder %v428, 8.507059e+37
    %v430 = vand.u32 %v403, 2147483648
    %v431 = vor.u32 1.1754944e-38, %v430
    %v432 = vsel %vm429, %v431, %v427
    %v433 = vmul.f32 %v397, %v432
    %436 = vrot.lane.b32.xlu0 %v228, 120
    %v437 = vpop.permute.xlu0 %436
    %438 = vrot.lane.b32.xlu0 %v231, 120
    %v439 = vpop.permute.xlu0 %438
    %v443 = vsel %vm269, %v418, 0
    %v446 = vsel %vm269, %v433, 0
    %448 = vmatpush.msra.mxu0 0.0
    %449 = vmatpush.msra.mxu0 0.0
    %450 = vmatpush.msra.mxu0 0.0
    %451 = vmatpush.msra.mxu0 0.0
    %452 = vmatpush.msra.mxu0 0.0
    %453 = vmatpush.msra.mxu0 0.0
    %454 = vmatpush.msra.mxu0 0.0
    %455 = vmatpush.msra.mxu0 0.0
    %456 = vmatpush.msra.mxu0 0.0
    %457 = vmatpush.msra.mxu0 0.0
    %458 = vmatpush.msra.mxu0 0.0
    %459 = vmatpush.msra.mxu0 0.0
    %460 = vmatpush.msra.mxu0 0.0
    %461 = vmatpush.msra.mxu0 0.0
    %462 = vmatpush.msra.mxu0 %v439
    %463 = vmatpush.msra.mxu0 %v437
    %464 = vmatmul.f32.gmra.mxu0 %v443
    %v465 = vpop.f32.mrf.mxu0
    %v466 = vadd.f32 0.0, %v465
    %467 = vmatmul.f32.gmra.mxu0 %v446
    %v468 = vpop.f32.mrf.mxu0
    %v469 = vadd.f32 0.0, %v468
    %470 = vdwg.mxu0
    %471 = vrot.lane.b32.xlu0 %v171, 112
    %v472 = vpop.permute.xlu0 %471
    %473 = vrot.lane.b32.xlu0 %v172, 112
    %v474 = vpop.permute.xlu0 %473
    %475 = vrot.lane.b32.xlu0 %v198, 112
    %v476 = vpop.permute.xlu0 %475
    %477 = vrot.lane.b32.xlu0 %v201, 112
    %v478 = vpop.permute.xlu0 %477
    %v479 = vsel %vm233, %v472, 0
    %v481 = vsel %vm233, %v474, 0
    %v483 = vsel %vm233, %v476, 0
    %v485 = vsel %vm233, %v478, 0
    %487 = vmatpush.xpose.msra.mxu0 0.0
    %488 = vmatpush.xpose.msra.mxu0 0.0
    %489 = vmatpush.xpose.msra.mxu0 0.0
    %490 = vmatpush.xpose.msra.mxu0 0.0
    %491 = vmatpush.xpose.msra.mxu0 0.0
    %492 = vmatpush.xpose.msra.mxu0 0.0
    %493 = vmatpush.xpose.msra.mxu0 0.0
    %494 = vmatpush.xpose.msra.mxu0 0.0
    %495 = vmatpush.xpose.msra.mxu0 0.0
    %496 = vmatpush.xpose.msra.mxu0 0.0
    %497 = vmatpush.xpose.msra.mxu0 0.0
    %498 = vmatpush.xpose.msra.mxu0 0.0
    %499 = vmatpush.xpose.msra.mxu0 0.0
    %500 = vmatpush.xpose.msra.mxu0 0.0
    %501 = vmatpush.xpose.msra.mxu0 %v485
    %502 = vmatpush.xpose.msra.mxu0 %v483
    %503 = vmatmul.f32.gmra.mxu0 %v479
    %v504 = vpop.f32.mrf.mxu0
    %v505 = vadd.f32 %v117, %v504
    %506 = vmatmul.f32.gmra.mxu0 %v481
    %v507 = vpop.f32.mrf.mxu0
    %v508 = vadd.f32 %v118, %v507
    %509 = vdwg.mxu0
    %v510 = vsel %vm269, %v505, -inf
    %511 = vmax.xlane.f32.xlu0 %v510
    %v512 = vpop.xlane.xlu0 %511
    %v513 = vsel %vm269, %v508, -inf
    %514 = vmax.xlane.f32.xlu0 %v513
    %v515 = vpop.xlane.xlu0 %514
    %v516 = vsub.f32 %v505, %v512
    %v517 = vsub.f32 %v508, %v515
    %v518 = vmul.f32 %v516, 1.442695
    %v519 = vpow.pop %v518
    %v520 = vmul.f32 %v517, 1.442695
    %v521 = vpow.pop %v520
    %v522 = vsel %vm269, %v519, 0.0
    %523 = vadd.xlane.f32.xlu0 %v522
    %v524 = vpop.xlane.xlu0 %523
    %v525 = vsel %vm269, %v521, 0.0
    %526 = vadd.xlane.f32.xlu0 %v525
    %v527 = vpop.xlane.xlu0 %526
    %v528 = vrcp.pop %v524
    %v529 = vmul.f32 %v524, %v528
    %v530 = vsub.f32 1.0, %v529
    %v531 = vmul.f32 %v528, %v530
    %v532 = vadd.f32 %v528, %v531
    %vm533 = vweird.f32 %v524
    %vm534 = vweird.f32 %v528
    %vm535 = vmor %vm533, %vm534
    %v536 = vsel %vm535, %v528, %v532
    %v537 = vand.u32 2147483647, %v524
    %vm538 = vcmp.eq.f32.partialorder %v537, 8.507059e+37
    %v539 = vand.u32 %v524, 2147483648
    %v540 = vor.u32 1.1754944e-38, %v539
    %v541 = vsel %vm538, %v540, %v536
    %v542 = vmul.f32 %v519, %v541
    %v543 = vrcp.pop %v527
    %v544 = vmul.f32 %v527, %v543
    %v545 = vsub.f32 1.0, %v544
    %v546 = vmul.f32 %v543, %v545
    %v547 = vadd.f32 %v543, %v546
    %vm548 = vweird.f32 %v527
    %vm549 = vweird.f32 %v543
    %vm550 = vmor %vm548, %vm549
    %v551 = vsel %vm550, %v543, %v547
    %v552 = vand.u32 2147483647, %v527
    %vm553 = vcmp.eq.f32.partialorder %v552, 8.507059e+37
    %v554 = vand.u32 %v527, 2147483648
    %v555 = vor.u32 1.1754944e-38, %v554
    %v556 = vsel %vm553, %v555, %v551
    %v557 = vmul.f32 %v521, %v556
    %558 = vrot.lane.b32.xlu0 %v228, 112
    %v559 = vpop.permute.xlu0 %558
    %560 = vrot.lane.b32.xlu0 %v231, 112
    %v561 = vpop.permute.xlu0 %560
    %v565 = vsel %vm269, %v542, 0
    %v568 = vsel %vm269, %v557, 0
    %570 = vmatpush.msra.mxu0 0.0
    %571 = vmatpush.msra.mxu0 0.0
    %572 = vmatpush.msra.mxu0 0.0
    %573 = vmatpush.msra.mxu0 0.0
    %574 = vmatpush.msra.mxu0 0.0
    %575 = vmatpush.msra.mxu0 0.0
    %576 = vmatpush.msra.mxu0 0.0
    %577 = vmatpush.msra.mxu0 0.0
    %578 = vmatpush.msra.mxu0 0.0
    %579 = vmatpush.msra.mxu0 0.0
    %580 = vmatpush.msra.mxu0 0.0
    %581 = vmatpush.msra.mxu0 0.0
    %582 = vmatpush.msra.mxu0 0.0
    %583 = vmatpush.msra.mxu0 0.0
    %584 = vmatpush.msra.mxu0 %v561
    %585 = vmatpush.msra.mxu0 %v559
    %586 = vmatmul.f32.gmra.mxu0 %v565
    %v587 = vpop.f32.mrf.mxu0
    %v588 = vadd.f32 0.0, %v587
    %589 = vmatmul.f32.gmra.mxu0 %v568
    %v590 = vpop.f32.mrf.mxu0
    %v591 = vadd.f32 0.0, %v590
    %592 = vdwg.mxu0
    %593 = vrot.lane.b32.xlu0 %v171, 104
    %v594 = vpop.permute.xlu0 %593
    %595 = vrot.lane.b32.xlu0 %v172, 104
    %v596 = vpop.permute.xlu0 %595
    %597 = vrot.lane.b32.xlu0 %v198, 104
    %v598 = vpop.permute.xlu0 %597
    %599 = vrot.lane.b32.xlu0 %v201, 104
    %v600 = vpop.permute.xlu0 %599
    %v601 = vsel %vm233, %v594, 0
    %v603 = vsel %vm233, %v596, 0
    %v605 = vsel %vm233, %v598, 0
    %v607 = vsel %vm233, %v600, 0
    %609 = vmatpush.xpose.msra.mxu0 0.0
    %610 = vmatpush.xpose.msra.mxu0 0.0
    %611 = vmatpush.xpose.msra.mxu0 0.0
    %612 = vmatpush.xpose.msra.mxu0 0.0
    %613 = vmatpush.xpose.msra.mxu0 0.0
    %614 = vmatpush.xpose.msra.mxu0 0.0
    %615 = vmatpush.xpose.msra.mxu0 0.0
    %616 = vmatpush.xpose.msra.mxu0 0.0
    %617 = vmatpush.xpose.msra.mxu0 0.0
    %618 = vmatpush.xpose.msra.mxu0 0.0
    %619 = vmatpush.xpose.msra.mxu0 0.0
    %620 = vmatpush.xpose.msra.mxu0 0.0
    %621 = vmatpush.xpose.msra.mxu0 0.0
    %622 = vmatpush.xpose.msra.mxu0 0.0
    %623 = vmatpush.xpose.msra.mxu0 %v607
    %624 = vmatpush.xpose.msra.mxu0 %v605
    %625 = vmatmul.f32.gmra.mxu0 %v601
    %v626 = vpop.f32.mrf.mxu0
    %v627 = vadd.f32 %v117, %v626
    %628 = vmatmul.f32.gmra.mxu0 %v603
    %v629 = vpop.f32.mrf.mxu0
    %v630 = vadd.f32 %v118, %v629
    %631 = vdwg.mxu0
    %v632 = vsel %vm269, %v627, -inf
    %633 = vmax.xlane.f32.xlu0 %v632
    %v634 = vpop.xlane.xlu0 %633
    %v635 = vsel %vm269, %v630, -inf
    %636 = vmax.xlane.f32.xlu0 %v635
    %v637 = vpop.xlane.xlu0 %636
    %v638 = vsub.f32 %v627, %v634
    %v639 = vsub.f32 %v630, %v637
    %v640 = vmul.f32 %v638, 1.442695
    %v641 = vpow.pop %v640
    %v642 = vmul.f32 %v639, 1.442695
    %v643 = vpow.pop %v642
    %v644 = vsel %vm269, %v641, 0.0
    %645 = vadd.xlane.f32.xlu0 %v644
    %v646 = vpop.xlane.xlu0 %645
    %v647 = vsel %vm269, %v643, 0.0
    %648 = vadd.xlane.f32.xlu0 %v647
    %v649 = vpop.xlane.xlu0 %648
    %v650 = vrcp.pop %v646
    %v651 = vmul.f32 %v646, %v650
    %v652 = vsub.f32 1.0, %v651
    %v653 = vmul.f32 %v650, %v652
    %v654 = vadd.f32 %v650, %v653
    %vm655 = vweird.f32 %v646
    %vm656 = vweird.f32 %v650
    %vm657 = vmor %vm655, %vm656
    %v658 = vsel %vm657, %v650, %v654
    %v659 = vand.u32 2147483647, %v646
    %vm660 = vcmp.eq.f32.partialorder %v659, 8.507059e+37
    %v661 = vand.u32 %v646, 2147483648
    %v662 = vor.u32 1.1754944e-38, %v661
    %v663 = vsel %vm660, %v662, %v658
    %v664 = vmul.f32 %v641, %v663
    %v665 = vrcp.pop %v649
    %v666 = vmul.f32 %v649, %v665
    %v667 = vsub.f32 1.0, %v666
    %v668 = vmul.f32 %v665, %v667
    %v669 = vadd.f32 %v665, %v668
    %vm670 = vweird.f32 %v649
    %vm671 = vweird.f32 %v665
    %vm672 = vmor %vm670, %vm671
    %v673 = vsel %vm672, %v665, %v669
    %v674 = vand.u32 2147483647, %v649
    %vm675 = vcmp.eq.f32.partialorder %v674, 8.507059e+37
    %v676 = vand.u32 %v649, 2147483648
    %v677 = vor.u32 1.1754944e-38, %v676
    %v678 = vsel %vm675, %v677, %v673
    %v679 = vmul.f32 %v643, %v678
    %680 = vrot.lane.b32.xlu0 %v228, 104
    %v681 = vpop.permute.xlu0 %680
    %682 = vrot.lane.b32.xlu0 %v231, 104
    %v683 = vpop.permute.xlu0 %682
    %v687 = vsel %vm269, %v664, 0
    %v690 = vsel %vm269, %v679, 0
    %692 = vmatpush.msra.mxu0 0.0
    %693 = vmatpush.msra.mxu0 0.0
    %694 = vmatpush.msra.mxu0 0.0
    %695 = vmatpush.msra.mxu0 0.0
    %696 = vmatpush.msra.mxu0 0.0
    %697 = vmatpush.msra.mxu0 0.0
    %698 = vmatpush.msra.mxu0 0.0
    %699 = vmatpush.msra.mxu0 0.0
    %700 = vmatpush.msra.mxu0 0.0
    %701 = vmatpush.msra.mxu0 0.0
    %702 = vmatpush.msra.mxu0 0.0
    %703 = vmatpush.msra.mxu0 0.0
    %704 = vmatpush.msra.mxu0 0.0
    %705 = vmatpush.msra.mxu0 0.0
    %706 = vmatpush.msra.mxu0 %v683
    %707 = vmatpush.msra.mxu0 %v681
    %708 = vmatmul.f32.gmra.mxu0 %v687
    %v709 = vpop.f32.mrf.mxu0
    %v710 = vadd.f32 0.0, %v709
    %711 = vmatmul.f32.gmra.mxu0 %v690
    %v712 = vpop.f32.mrf.mxu0
    %v713 = vadd.f32 0.0, %v712
    %714 = vdwg.mxu0
    %717 = vrot.lane.b32.xlu0 %v466, 8
    %v718 = vpop.permute.xlu0 %717
    %719 = vrot.lane.b32.xlu0 %v469, 8
    %v720 = vpop.permute.xlu0 %719
    %725 = vrot.lane.b32.xlu0 %v588, 16
    %v726 = vpop.permute.xlu0 %725
    %727 = vrot.lane.b32.xlu0 %v591, 16
    %v728 = vpop.permute.xlu0 %727
    %733 = vrot.lane.b32.xlu0 %v710, 24
    %v734 = vpop.permute.xlu0 %733
    %735 = vrot.lane.b32.xlu0 %v713, 24
    %v736 = vpop.permute.xlu0 %735
    %v739 = vsel %vm233, %v342, %v718
    %v740 = vsel %vm233, %v345, %v720
    %v741 = vsel %vm269, %v739, %v726
    %v742 = vsel %vm269, %v740, %v728
    %vm743 = vcmask 195584
    %v744 = vsel %vm743, %v741, %v734
    %v745 = vsel %vm743, %v742, %v736
    %v746 = vperm.slane %v138, 3
    %v748 = vsel %vm141, %v744, 0
    %v751 = vsel %vm141, %v745, 0
    %753 = vmatpush.msra.mxu0 0.0
    %754 = vmatpush.msra.mxu0 0.0
    %755 = vmatpush.msra.mxu0 0.0
    %756 = vmatpush.msra.mxu0 0.0
    %757 = vmatpush.msra.mxu0 0.0
    %758 = vmatpush.msra.mxu0 0.0
    %759 = vmatpush.msra.mxu0 0.0
    %760 = vmatpush.msra.mxu0 0.0
    %761 = vmatpush.msra.mxu0 0.0
    %762 = vmatpush.msra.mxu0 0.0
    %763 = vmatpush.msra.mxu0 0.0
    %764 = vmatpush.msra.mxu0 0.0
    %765 = vmatpush.msra.mxu0 %v137
    %766 = vmatpush.msra.mxu0 %v136
    %767 = vmatpush.msra.mxu0 %v135
    %768 = vmatpush.msra.mxu0 %v134
    %769 = vmatmul.f32.gmra.mxu0 %v748
    %v770 = vpop.f32.mrf.mxu0
    %v771 = vadd.f32 %v746, %v770
    %772 = vmatmul.f32.gmra.mxu0 %v751
    %v773 = vpop.f32.mrf.mxu0
    %v774 = vadd.f32 %v746, %v773
    %775 = vdwg.mxu0
    %v776 = vadd.f32 %v111, %v771
    %v777 = vadd.f32 %v112, %v774
    %v778 = vsel %vm141, %v776, 0.0
    %779 = vadd.xlane.f32.xlu0 %v778
    %v780 = vpop.xlane.xlu0 %779
    %v781 = vsel %vm141, %v777, 0.0
    %782 = vadd.xlane.f32.xlu0 %v781
    %v783 = vpop.xlane.xlu0 %782
    %v784 = vrcp.pop 32.0
    %v785 = vmul.f32 32.0, %v784
    %v786 = vsub.f32 1.0, %v785
    %v787 = vmul.f32 %v784, %v786
    %v788 = vadd.f32 %v784, %v787
    %vm789 = vweird.f32 %v784
    %v790 = vsel %vm789, %v784, %v788
    %v791 = vmul.f32 %v780, %v790
    %v792 = vmul.f32 %v783, %v790
    %v793 = vsub.f32 %v776, %v791
    %v794 = vsub.f32 %v777, %v792
    %v795 = vmul.f32 %v793, %v793
    %v796 = vmul.f32 %v794, %v794
    %v797 = vsel %vm141, %v795, 0.0
    %798 = vadd.xlane.f32.xlu0 %v797
    %v799 = vpop.xlane.xlu0 %798
    %v800 = vsel %vm141, %v796, 0.0
    %801 = vadd.xlane.f32.xlu0 %v800
    %v802 = vpop.xlane.xlu0 %801
    %v803 = vmul.f32 %v799, %v790
    %v804 = vmul.f32 %v802, %v790
    %v805 = vadd.f32 %v803, 1e-06
    %v806 = vadd.f32 %v804, 1e-06
    %v807 = vrsqrt.pop %v805
    %v808 = vmul.f32 %v807, %v805
    %v809 = vmul.f32 %v808, %v807
    %v810 = vmul.f32 0.5, %v809
    %v811 = vsub.f32 1.5, %v810
    %v812 = vmul.f32 %v807, %v811
    %vm813 = vweird.f32 %v805
    %vm814 = vweird.f32 %v807
    %vm815 = vmor %vm813, %vm814
    %v816 = vsel %vm815, %v807, %v812
    %v817 = vrsqrt.pop %v806
    %v818 = vmul.f32 %v817, %v806
    %v819 = vmul.f32 %v818, %v817
    %v820 = vmul.f32 0.5, %v819
    %v821 = vsub.f32 1.5, %v820
    %v822 = vmul.f32 %v817, %v821
    %vm823 = vweird.f32 %v806
    %vm824 = vweird.f32 %v817
    %vm825 = vmor %vm823, %vm824
    %v826 = vsel %vm825, %v817, %v822
    %v827 = vmul.f32 %v793, %v816
    %v828 = vmul.f32 %v794, %v826
    %v829 = vperm.slane %v138, 4
    %v830 = vmul.f32 %v827, %v829
    %v831 = vmul.f32 %v828, %v829
    %v832 = vperm.slane %v138, 5
    %v833 = vadd.f32 %v830, %v832
    %v834 = vadd.f32 %v831, %v832
    %v835 = vld [vmem:[%s6] sm:$0xff]
    %v836 = vld [vmem:[%s6 + $0x8] sm:$0xff]
    %v837 = vld [vmem:[%s6 + $0x10] sm:$0xff]
    %v838 = vld [vmem:[%s6 + $0x18] sm:$0xff]
    %v839 = vld [vmem:[%s7] sm:$0x1]
    %v841 = vperm.slane %v839, 0
    %v844 = vsel %vm141, %v833, 0
    %v847 = vsel %vm141, %v834, 0
    %849 = vmatpush.msra.mxu0 0.0
    %850 = vmatpush.msra.mxu0 0.0
    %851 = vmatpush.msra.mxu0 0.0
    %852 = vmatpush.msra.mxu0 0.0
    %853 = vmatpush.msra.mxu0 0.0
    %854 = vmatpush.msra.mxu0 0.0
    %855 = vmatpush.msra.mxu0 0.0
    %856 = vmatpush.msra.mxu0 0.0
    %857 = vmatpush.msra.mxu0 0.0
    %858 = vmatpush.msra.mxu0 0.0
    %859 = vmatpush.msra.mxu0 0.0
    %860 = vmatpush.msra.mxu0 0.0
    %861 = vmatpush.msra.mxu0 %v838
    %862 = vmatpush.msra.mxu0 %v837
    %863 = vmatpush.msra.mxu0 %v836
    %864 = vmatpush.msra.mxu0 %v835
    %865 = vmatmul.f32.gmra.mxu0 %v844
    %v866 = vpop.f32.mrf.mxu0
    %v867 = vadd.f32 %v841, %v866
    %868 = vmatmul.f32.gmra.mxu0 %v847
    %v869 = vpop.f32.mrf.mxu0
    %v870 = vadd.f32 %v841, %v869
    %871 = vdwg.mxu0
    %v872 = vmax.f32 %v867, 0.0
    %v873 = vmax.f32 %v870, 0.0
    %v874 = vld [vmem:[%s8] sm:$0xff]
    %v875 = vld [vmem:[%s8 + $0x8] sm:$0xff]
    %v876 = vld [vmem:[%s8 + $0x10] sm:$0xff]
    %v877 = vld [vmem:[%s8 + $0x18] sm:$0xff]
    %v878 = vld [vmem:[%s8 + $0x20] sm:$0xff]
    %v879 = vld [vmem:[%s8 + $0x28] sm:$0xff]
    %v880 = vld [vmem:[%s8 + $0x30] sm:$0xff]
    %v881 = vld [vmem:[%s8 + $0x38] sm:$0xff]
    %v882 = vld [vmem:[%s8 + $0x40] sm:$0xff]
    %v883 = vld [vmem:[%s8 + $0x48] sm:$0xff]
    %v884 = vld [vmem:[%s8 + $0x50] sm:$0xff]
    %v885 = vld [vmem:[%s8 + $0x58] sm:$0xff]
    %v886 = vld [vmem:[%s8 + $0x60] sm:$0xff]
    %v887 = vld [vmem:[%s8 + $0x68] sm:$0xff]
    %v888 = vld [vmem:[%s8 + $0x70] sm:$0xff]
    %v889 = vld [vmem:[%s8 + $0x78] sm:$0xff]
    %v890 = vperm.slane %v138, 6
    %891 = vmatpush.msra.mxu0 %v889
    %892 = vmatpush.msra.mxu0 %v888
    %893 = vmatpush.msra.mxu0 %v887
    %894 = vmatpush.msra.mxu0 %v886
    %895 = vmatpush.msra.mxu0 %v885
    %896 = vmatpush.msra.mxu0 %v884
    %897 = vmatpush.msra.mxu0 %v883
    %898 = vmatpush.msra.mxu0 %v882
    %899 = vmatpush.msra.mxu0 %v881
    %900 = vmatpush.msra.mxu0 %v880
    %901 = vmatpush.msra.mxu0 %v879
    %902 = vmatpush.msra.mxu0 %v878
    %903 = vmatpush.msra.mxu0 %v877
    %904 = vmatpush.msra.mxu0 %v876
    %905 = vmatpush.msra.mxu0 %v875
    %906 = vmatpush.msra.mxu0 %v874
    %907 = vmatmul.f32.gmra.mxu0 %v872
    %v908 = vpop.f32.mrf.mxu0
    %v909 = vadd.f32 %v890, %v908
    %910 = vmatmul.f32.gmra.mxu0 %v873
    %v911 = vpop.f32.mrf.mxu0
    %v912 = vadd.f32 %v890, %v911
    %913 = vdwg.mxu0
    %v914 = vadd.f32 %v833, %v909
    %v915 = vadd.f32 %v834, %v912
    %v916 = vsel %vm141, %v914, 0.0
    %917 = vadd.xlane.f32.xlu0 %v916
    %v918 = vpop.xlane.xlu0 %917
    %v919 = vsel %vm141, %v915, 0.0
    %920 = vadd.xlane.f32.xlu0 %v919
    %v921 = vpop.xlane.xlu0 %920
    %v922 = vmul.f32 %v918, %v790
    %v923 = vmul.f32 %v921, %v790
    %v924 = vsub.f32 %v914, %v922
    %v925 = vsub.f32 %v915, %v923
    %v926 = vmul.f32 %v924, %v924
    %v927 = vmul.f32 %v925, %v925
    %v928 = vsel %vm141, %v926, 0.0
    %929 = vadd.xlane.f32.xlu0 %v928
    %v930 = vpop.xlane.xlu0 %929
    %v931 = vsel %vm141, %v927, 0.0
    %932 = vadd.xlane.f32.xlu0 %v931
    %v933 = vpop.xlane.xlu0 %932
    %v934 = vmul.f32 %v930, %v790
    %v935 = vmul.f32 %v933, %v790
    %v936 = vadd.f32 %v934, 1e-06
    %v937 = vadd.f32 %v935, 1e-06
    %v938 = vrsqrt.pop %v936
    %v939 = vmul.f32 %v938, %v936
    %v940 = vmul.f32 %v939, %v938
    %v941 = vmul.f32 0.5, %v940
    %v942 = vsub.f32 1.5, %v941
    %v943 = vmul.f32 %v938, %v942
    %vm944 = vweird.f32 %v936
    %vm945 = vweird.f32 %v938
    %vm946 = vmor %vm944, %vm945
    %v947 = vsel %vm946, %v938, %v943
    %v948 = vrsqrt.pop %v937
    %v949 = vmul.f32 %v948, %v937
    %v950 = vmul.f32 %v949, %v948
    %v951 = vmul.f32 0.5, %v950
    %v952 = vsub.f32 1.5, %v951
    %v953 = vmul.f32 %v948, %v952
    %vm954 = vweird.f32 %v937
    %vm955 = vweird.f32 %v948
    %vm956 = vmor %vm954, %vm955
    %v957 = vsel %vm956, %v948, %v953
    %v958 = vmul.f32 %v924, %v947
    %v959 = vmul.f32 %v925, %v957
    %v960 = vperm.slane %v138, 7
    %v961 = vmul.f32 %v958, %v960
    %v962 = vmul.f32 %v959, %v960
    %v963 = vperm.slane %v139, 0
    %v964 = vadd.f32 %v961, %v963
    %v965 = vadd.f32 %v962, %v963
    %966 = vst.msk [vmem:[#allocation11] sm:$0xff] %vm141, %v964
    %967 = vst.msk [vmem:[#allocation11 + $0x8] sm:$0xff] %vm141, %v965
    // Predicated region
    $region58: #{tpu_custom_call.1} parent=1 // pred_check
      _
    $region59: #{tpu_custom_call.1} parent=1 // pred_check_branch
      %969 = sbr.rel (0) target = $region61
    $region60: #{tpu_custom_call.1} parent=1 // pred_region
      %971 = vsyncadd [#allocation4], 0
      %s972 = sshll.u32 [#allocation11], 4
      %s973 = int_to_ptr.vmem [resolvable:$true] %s972
      %s974 = sshll.u32 %s9, 4
      %s975 = int_to_ptr.hbm [resolvable:$true] %s974
      %980 = dma.vmem_to_hbm [thread:$0]  %s973, 256, %s975, [#allocation4], 128, 128, 8
    $region61: #{tpu_custom_call.1} parent=1 // pred_fallthru
      _
    // Predicated region
    $region62: #{tpu_custom_call.1} parent=1 // pred_check
      _
    $region63: #{tpu_custom_call.1} parent=1 // pred_check_branch
      %982 = sbr.rel (0) target = $region65
    $region64: #{tpu_custom_call.1} parent=1 // pred_region
      %984 = dma.done [#allocation4], 256
    $region65: #{tpu_custom_call.1} parent=1 // pred_fallthru
      _
    %985 = vsyncpa [#allocation3], 1
    %986 = vsyncpa [#allocation6], 1
    %987 = vsyncpa [#allocation9], 1
    %988 = vsyncpa [#allocation4], 1

</llo_original>
